<compile_context>
chip_gen: v6e
topology: v6e:2x2x1
jax: 0.10.0
libtpu: 0.0.40
codegen_flags: <defaults>
</compile_context>

<pallas_src>
import math

import jax
import jax.numpy as jnp
from jax.experimental import pallas as pl
from jax.experimental.pallas import tpu as pltpu


FC1_OUT = 24
FC2_OUT = 12
LANE = 128           # padded feature width (lane-dense blocks)
DEFAULT_BLOCK_ROWS = 512


def _round_up(n, m):
    return ((n + m - 1) // m) * m


# -----------------------------------------------------------------------------
# Pallas kernel: fused 3-layer MLP on one (TB, *) batch tile.
# -----------------------------------------------------------------------------
def _dqn_mlp_kernel(x_ref, w1_ref, b1_ref, w2_ref, b2_ref, w3_ref, b3_ref,
                    o_ref):
    x = x_ref[...]                                               # (TB, D_in) f32

    # fc1 + relu   -> (TB, 128), cols [24:] are exactly 0
    h1 = jnp.dot(x, w1_ref[...], preferred_element_type=jnp.float32)
    h1 = jnp.maximum(h1 + b1_ref[...], 0.0)

    # fc2 + relu   -> (TB, 128), cols [12:] are exactly 0
    h2 = jnp.dot(h1, w2_ref[...], preferred_element_type=jnp.float32)
    h2 = jnp.maximum(h2 + b2_ref[...], 0.0)

    # fc3 (no activation) -> (TB, 128), cols [d_out:] are exactly 0
    out = jnp.dot(h2, w3_ref[...], preferred_element_type=jnp.float32)
    o_ref[...] = (out + b3_ref[...]).astype(o_ref.dtype)


# -----------------------------------------------------------------------------
# Wrapper
# -----------------------------------------------------------------------------
def dqn_forward(x, padded_params, output_size, *, block_rows=DEFAULT_BLOCK_ROWS):
    """Forward pass equivalent to DQNTorchAgent2.forward.

    x:             (batch, input_size) float32
    padded_params: dict of lane-padded params from pad_params()
    output_size:   true number of output features (columns beyond it are 0)
    returns        (batch, output_size) float32
    """
    batch, d_in = x.shape

    # Batch tile: large, multiple of 8 (sublane), covering the (padded) batch.
    tb = min(block_rows, _round_up(batch, 8))
    padded_batch = _round_up(batch, tb)
    if padded_batch != batch:
        x = jnp.pad(x, ((0, padded_batch - batch), (0, 0)))

    grid = (pl.cdiv(padded_batch, tb),)

    # Weights / biases: constant index_map -> fetched once, VMEM-resident.
    resident = lambda arr: pl.BlockSpec(arr.shape, lambda i: (0, 0))

    operands = (
        x,
        padded_params["w1"], padded_params["b1"],
        padded_params["w2"], padded_params["b2"],
        padded_params["w3"], padded_params["b3"],
    )
    in_specs = [pl.BlockSpec((tb, d_in), lambda i: (i, 0))]
    in_specs += [resident(op) for op in operands[1:]]

    out_padded = pl.pallas_call(
        _dqn_mlp_kernel,
        out_shape=jax.ShapeDtypeStruct((padded_batch, LANE), jnp.float32),
        grid=grid,
        in_specs=in_specs,
        out_specs=pl.BlockSpec((tb, LANE), lambda i: (i, 0)),
        compiler_params=pltpu.CompilerParams(
            dimension_semantics=("parallel",)),   # megacore on v7x
    )(*operands)

    return out_padded[:batch, :output_size]


# -----------------------------------------------------------------------------
# Parameter init (matches torch.nn.Linear default: U(-k, k), k = 1/sqrt(fan_in),
# stored transposed as [in_features, out_features]) + lane padding.
# -----------------------------------------------------------------------------
def init_params(key, input_size, output_size):
    sizes = [(input_size, FC1_OUT), (FC1_OUT, FC2_OUT), (FC2_OUT, output_size)]
    raw = {}
    for idx, (fan_in, fan_out) in enumerate(sizes, start=1):
        key, kw, kb = jax.random.split(key, 3)
        bound = 1.0 / math.sqrt(fan_in)
        raw[f"w{idx}"] = jax.random.uniform(
            kw, (fan_in, fan_out), jnp.float32, minval=-bound, maxval=bound)
        raw[f"b{idx}"] = jax.random.uniform(
            kb, (1, fan_out), jnp.float32, minval=-bound, maxval=bound)
    return raw


def pad_params(raw, input_size):
    """Zero-pad all out-dims (and hidden in-dims) to the 128-lane width."""
    def pad_to(arr, rows, cols):
        r, c = arr.shape
        return jnp.pad(arr, ((0, rows - r), (0, cols - c)))

    return {
        "w1": pad_to(raw["w1"], input_size, LANE),   # (D_in, 128)
        "b1": pad_to(raw["b1"], 1, LANE),            # (1, 128)
        "w2": pad_to(raw["w2"], LANE, LANE),         # (128, 128)
        "b2": pad_to(raw["b2"], 1, LANE),
        "w3": pad_to(raw["w3"], LANE, LANE),         # (128, 128)
        "b3": pad_to(raw["b3"], 1, LANE),
    }


# Pure-JAX reference (uses the unpadded weights) for correctness checking.
def dqn_forward_ref(x, p):
    h1 = jnp.maximum(x @ p["w1"] + p["b1"], 0.0)
    h2 = jnp.maximum(h1 @ p["w2"] + p["b2"], 0.0)
    return h2 @ p["w3"] + p["b3"]


# TODO(synk): replay memory / RMSprop update / epsilon-greedy action selection
# from the torch module are host-side training logic, not part of forward().

if __name__ == "__main__":
    # CartPole-like DQN shapes.
    input_size = 4
    output_size = 2

    key = jax.random.PRNGKey(0)
    key, kp = jax.random.split(key)
    raw = init_params(kp, input_size, output_size)
    padded = pad_params(raw, input_size)

    # Small batch (single grid step).
    key, kx = jax.random.split(key)
    x_small = jax.random.normal(kx, (8, input_size), dtype=jnp.float32)
    out_small = jax.block_until_ready(dqn_forward(x_small, padded, output_size))
    ref_small = dqn_forward_ref(x_small, raw)
    assert out_small.shape == (8, output_size)
    assert jnp.allclose(out_small, ref_small, atol=1e-5, rtol=1e-5), \
        "small-batch mismatch vs reference"

    # Larger batch exercising the batch grid (2 tiles of 512 rows, padded).
    key, kx2 = jax.random.split(key)
    x_big = jax.random.normal(kx2, (600, input_size), dtype=jnp.float32)
    out_big = jax.block_until_ready(dqn_forward(x_big, padded, output_size))
    ref_big = dqn_forward_ref(x_big, raw)
    assert out_big.shape == (600, output_size)
    assert jnp.allclose(out_big, ref_big, atol=1e-5, rtol=1e-5), \
        "grid-batch mismatch vs reference"

    print("KERNEL_OK")
</pallas_src>

<mosaic_0001>
module attributes {stable_mosaic.version = 11 : i64} {
  func.func @_dqn_mlp_kernel(%arg0: i32, %arg1: memref<8x4xf32, #tpu.memory_space<vmem>>, %arg2: memref<4x128xf32, #tpu.memory_space<vmem>>, %arg3: memref<1x128xf32, #tpu.memory_space<vmem>>, %arg4: memref<128x128xf32, #tpu.memory_space<vmem>>, %arg5: memref<1x128xf32, #tpu.memory_space<vmem>>, %arg6: memref<128x128xf32, #tpu.memory_space<vmem>>, %arg7: memref<1x128xf32, #tpu.memory_space<vmem>>, %arg8: memref<8x128xf32, #tpu.memory_space<vmem>>) attributes {dimension_semantics = [#tpu.dimension_semantics<parallel>], iteration_bounds = array<i64: 1>, scalar_prefetch = 0 : i64, scratch_operands = 0 : i64, tpu.core_type = #tpu.core_type<tc>, window_params = [{transform_indices = @transform_0, window_bounds = array<i64: 8, 4>}, {pipeline_mode = #tpu.pipeline_mode<synchronous>, transform_indices = @transform_1, window_bounds = array<i64: 4, 128>}, {pipeline_mode = #tpu.pipeline_mode<synchronous>, transform_indices = @transform_2, window_bounds = array<i64: 1, 128>}, {pipeline_mode = #tpu.pipeline_mode<synchronous>, transform_indices = @transform_3, window_bounds = array<i64: 128, 128>}, {pipeline_mode = #tpu.pipeline_mode<synchronous>, transform_indices = @transform_4, window_bounds = array<i64: 1, 128>}, {pipeline_mode = #tpu.pipeline_mode<synchronous>, transform_indices = @transform_5, window_bounds = array<i64: 128, 128>}, {pipeline_mode = #tpu.pipeline_mode<synchronous>, transform_indices = @transform_6, window_bounds = array<i64: 1, 128>}, {transform_indices = @transform_7, window_bounds = array<i64: 8, 128>}]} {
    %c0 = arith.constant 0 : index
    %c0_0 = arith.constant 0 : index
    %0 = vector.load %arg1[%c0, %c0_0] : memref<8x4xf32, #tpu.memory_space<vmem>>, vector<8x4xf32>
    %c0_1 = arith.constant 0 : index
    %c0_2 = arith.constant 0 : index
    %1 = vector.load %arg2[%c0_1, %c0_2] : memref<4x128xf32, #tpu.memory_space<vmem>>, vector<4x128xf32>
    %cst = arith.constant dense<0.000000e+00> : vector<8x128xf32>
    %2 = tpu.matmul %0, %1, %cst {dimension_numbers = #tpu.dot_dimension_numbers<[1], [0], [0], [1], [0, 0, 1, 1], [], []>} : vector<8x4xf32>, vector<4x128xf32>, vector<8x128xf32> -> vector<8x128xf32>
    %c0_3 = arith.constant 0 : index
    %c0_4 = arith.constant 0 : index
    %3 = vector.load %arg3[%c0_3, %c0_4] : memref<1x128xf32, #tpu.memory_space<vmem>>, vector<1x128xf32>
    %4 = vector.broadcast %3 : vector<1x128xf32> to vector<8x128xf32>
    %5 = arith.addf %2, %4 : vector<8x128xf32>
    %cst_5 = arith.constant 0.000000e+00 : f32
    %6 = vector.broadcast %cst_5 : f32 to vector<8x128xf32>
    %7 = arith.maximumf %5, %6 : vector<8x128xf32>
    %c0_6 = arith.constant 0 : index
    %c0_7 = arith.constant 0 : index
    %8 = vector.load %arg4[%c0_6, %c0_7] : memref<128x128xf32, #tpu.memory_space<vmem>>, vector<128x128xf32>
    %cst_8 = arith.constant dense<0.000000e+00> : vector<8x128xf32>
    %9 = tpu.matmul %7, %8, %cst_8 {dimension_numbers = #tpu.dot_dimension_numbers<[1], [0], [0], [1], [0, 0, 1, 1], [], []>} : vector<8x128xf32>, vector<128x128xf32>, vector<8x128xf32> -> vector<8x128xf32>
    %c0_9 = arith.constant 0 : index
    %c0_10 = arith.constant 0 : index
    %10 = vector.load %arg5[%c0_9, %c0_10] : memref<1x128xf32, #tpu.memory_space<vmem>>, vector<1x128xf32>
    %11 = vector.broadcast %10 : vector<1x128xf32> to vector<8x128xf32>
    %12 = arith.addf %9, %11 : vector<8x128xf32>
    %cst_11 = arith.constant 0.000000e+00 : f32
    %13 = vector.broadcast %cst_11 : f32 to vector<8x128xf32>
    %14 = arith.maximumf %12, %13 : vector<8x128xf32>
    %c0_12 = arith.constant 0 : index
    %c0_13 = arith.constant 0 : index
    %15 = vector.load %arg6[%c0_12, %c0_13] : memref<128x128xf32, #tpu.memory_space<vmem>>, vector<128x128xf32>
    %cst_14 = arith.constant dense<0.000000e+00> : vector<8x128xf32>
    %16 = tpu.matmul %14, %15, %cst_14 {dimension_numbers = #tpu.dot_dimension_numbers<[1], [0], [0], [1], [0, 0, 1, 1], [], []>} : vector<8x128xf32>, vector<128x128xf32>, vector<8x128xf32> -> vector<8x128xf32>
    %c0_15 = arith.constant 0 : index
    %c0_16 = arith.constant 0 : index
    %17 = vector.load %arg7[%c0_15, %c0_16] : memref<1x128xf32, #tpu.memory_space<vmem>>, vector<1x128xf32>
    %18 = vector.broadcast %17 : vector<1x128xf32> to vector<8x128xf32>
    %19 = arith.addf %16, %18 : vector<8x128xf32>
    %c0_17 = arith.constant 0 : index
    %c0_18 = arith.constant 0 : index
    %20 = vector.load %arg8[%c0_17, %c0_18] : memref<8x128xf32, #tpu.memory_space<vmem>>, vector<8x128xf32>
    tpu.vector_store %arg8[%c0_17, %c0_18], %19 {strides = array<i32>} : memref<8x128xf32, #tpu.memory_space<vmem>>, vector<8x128xf32>,
    return
  }
  func.func @transform_0(%arg0: i32) -> (i32, i32) {
    %c0_i32 = arith.constant 0 : i32
    %c0_i32_0 = arith.constant 0 : i32
    return %arg0, %c0_i32 : i32, i32
  }
  func.func @transform_1(%arg0: i32) -> (i32, i32) {
    %c0_i32 = arith.constant 0 : i32
    %c0_i32_0 = arith.constant 0 : i32
    %c0_i32_1 = arith.constant 0 : i32
    return %c0_i32, %c0_i32_0 : i32, i32
  }
  func.func @transform_2(%arg0: i32) -> (i32, i32) {
    %c0_i32 = arith.constant 0 : i32
    %c0_i32_0 = arith.constant 0 : i32
    %c0_i32_1 = arith.constant 0 : i32
    return %c0_i32, %c0_i32_0 : i32, i32
  }
  func.func @transform_3(%arg0: i32) -> (i32, i32) {
    %c0_i32 = arith.constant 0 : i32
    %c0_i32_0 = arith.constant 0 : i32
    %c0_i32_1 = arith.constant 0 : i32
    return %c0_i32, %c0_i32_0 : i32, i32
  }
  func.func @transform_4(%arg0: i32) -> (i32, i32) {
    %c0_i32 = arith.constant 0 : i32
    %c0_i32_0 = arith.constant 0 : i32
    %c0_i32_1 = arith.constant 0 : i32
    return %c0_i32, %c0_i32_0 : i32, i32
  }
  func.func @transform_5(%arg0: i32) -> (i32, i32) {
    %c0_i32 = arith.constant 0 : i32
    %c0_i32_0 = arith.constant 0 : i32
    %c0_i32_1 = arith.constant 0 : i32
    return %c0_i32, %c0_i32_0 : i32, i32
  }
  func.func @transform_6(%arg0: i32) -> (i32, i32) {
    %c0_i32 = arith.constant 0 : i32
    %c0_i32_0 = arith.constant 0 : i32
    %c0_i32_1 = arith.constant 0 : i32
    return %c0_i32, %c0_i32_0 : i32, i32
  }
  func.func @transform_7(%arg0: i32) -> (i32, i32) {
    %c0_i32 = arith.constant 0 : i32
    %c0_i32_0 = arith.constant 0 : i32
    return %arg0, %c0_i32 : i32, i32
  }
}

</mosaic_0001>

<llo_original>
// kernel: tpu_custom_call.1
$region0: #{tpu_custom_call.1}
  #allocation0 [shape = 'u32[]', space=smem, size = 0x4, offset = 0x4, fixed_abs, tag = 'smem constant byte address 0x4 - core index']
  #allocation1 [shape = 'u32[144,128]{1,0:T(1,128)}', space=vmem, size = 0x12000, scoped, tag = 'internal scratch']
  %s0 = inlined_call_operand.vmem [shape: f32[8,4], index: 0, kind: input, shape index: {}]
  %s1 = inlined_call_operand.vmem [shape: f32[4,128], index: 1, kind: input, shape index: {}]
  %s2 = inlined_call_operand.vmem [shape: f32[1,128], index: 2, kind: input, shape index: {}]
  %s3 = inlined_call_operand.hbm [shape: f32[128,128], index: 3, kind: input, shape index: {}]
  %s4 = inlined_call_operand.vmem [shape: f32[1,128], index: 4, kind: input, shape index: {}]
  %s5 = inlined_call_operand.hbm [shape: f32[128,128], index: 5, kind: input, shape index: {}]
  %s6 = inlined_call_operand.vmem [shape: f32[1,128], index: 6, kind: input, shape index: {}]
  %s7 = inlined_call_operand.hbm [shape: f32[8,128], index: 7, kind: output, shape index: {}]
  %s8 = sld [smem:[#allocation0]]
  $region46: #{tpu_custom_call.1} parent=0
    _
  %s10 = ssub.s32 1, %s8
  %s11 = scalar_select 0, %s10, %s8
  $region1: #{tpu_custom_call.1} parent=0
    #allocation2 [shape = 'u8[65536]{0}', space=vmem, size = 0x10000, scoped, tag = 'input window, operand 3, single buffered']
    #allocation3 [shape = 's32[1]{0}', space=sflag, size = 0x4, scoped, tag = 'scoped memory for tpu_custom_call.1']
    #allocation4 [shape = 's32[1]{0}', space=sflag, size = 0x4, scoped, tag = 'scoped memory for tpu_custom_call.1']
    #allocation5 [shape = 'u8[65536]{0}', space=vmem, size = 0x10000, scoped, tag = 'input window, operand 5, single buffered']
    #allocation6 [shape = 's32[1]{0}', space=sflag, size = 0x4, scoped, tag = 'scoped memory for tpu_custom_call.1']
    #allocation7 [shape = 'u8[4096]{0}', space=vmem, size = 0x1000, scoped, tag = 'output window, operand 0, single buffered']
    %12 = vsyncpa [#allocation3], 0
    %13 = vsyncpa [#allocation6], 0
    %14 = vsyncpa [#allocation4], 0
    // Predicated region
    $region2: #{tpu_custom_call.1} parent=1 // pred_check
      _
    $region3: #{tpu_custom_call.1} parent=1 // pred_check_branch
      %16 = sbr.rel (0) target = $region5
    $region4: #{tpu_custom_call.1} parent=1 // pred_region
      _
    $region5: #{tpu_custom_call.1} parent=1 // pred_fallthru
      _
    // Predicated region
    $region6: #{tpu_custom_call.1} parent=1 // pred_check
      _
    $region7: #{tpu_custom_call.1} parent=1 // pred_check_branch
      %18 = sbr.rel (0) target = $region9
    $region8: #{tpu_custom_call.1} parent=1 // pred_region
      _
    $region9: #{tpu_custom_call.1} parent=1 // pred_fallthru
      _
    // Predicated region
    $region10: #{tpu_custom_call.1} parent=1 // pred_check
      _
    $region11: #{tpu_custom_call.1} parent=1 // pred_check_branch
      %20 = sbr.rel (0) target = $region13
    $region12: #{tpu_custom_call.1} parent=1 // pred_region
      _
    $region13: #{tpu_custom_call.1} parent=1 // pred_fallthru
      _
    // Predicated region
    $region14: #{tpu_custom_call.1} parent=1 // pred_check
      _
    $region15: #{tpu_custom_call.1} parent=1 // pred_check_branch
      %22 = sbr.rel (0) target = $region17
    $region16: #{tpu_custom_call.1} parent=1 // pred_region
      %s24 = ssub.s32 2048, 2048
      %25 = vsyncadd [#allocation3], %s24
      %s26 = sshll.u32 [#allocation2], 4
      %s27 = int_to_ptr.vmem [resolvable:$true] %s26
      %32 = dma.hbm_to_vmem [thread:$0]  %s3, 2048, %s27, [#allocation3], 128, 128, 8
    $region17: #{tpu_custom_call.1} parent=1 // pred_fallthru
      _
    // Predicated region
    $region18: #{tpu_custom_call.1} parent=1 // pred_check
      _
    $region19: #{tpu_custom_call.1} parent=1 // pred_check_branch
      %34 = sbr.rel (0) target = $region21
    $region20: #{tpu_custom_call.1} parent=1 // pred_region
      _
    $region21: #{tpu_custom_call.1} parent=1 // pred_fallthru
      _
    // Predicated region
    $region22: #{tpu_custom_call.1} parent=1 // pred_check
      _
    $region23: #{tpu_custom_call.1} parent=1 // pred_check_branch
      %36 = sbr.rel (0) target = $region25
    $region24: #{tpu_custom_call.1} parent=1 // pred_region
      %s38 = ssub.s32 2048, 2048
      %39 = vsyncadd [#allocation6], %s38
      %s40 = sshll.u32 [#allocation5], 4
      %s41 = int_to_ptr.vmem [resolvable:$true] %s40
      %46 = dma.hbm_to_vmem [thread:$0]  %s5, 2048, %s41, [#allocation6], 128, 128, 8
    $region25: #{tpu_custom_call.1} parent=1 // pred_fallthru
      _
    // Predicated region
    $region26: #{tpu_custom_call.1} parent=1 // pred_check
      _
    $region27: #{tpu_custom_call.1} parent=1 // pred_check_branch
      %48 = sbr.rel (0) target = $region29
    $region28: #{tpu_custom_call.1} parent=1 // pred_region
      _
    $region29: #{tpu_custom_call.1} parent=1 // pred_fallthru
      _
    // Predicated region
    $region30: #{tpu_custom_call.1} parent=1 // pred_check
      _
    $region31: #{tpu_custom_call.1} parent=1 // pred_check_branch
      %50 = sbr.rel (0) target = $region33
    $region32: #{tpu_custom_call.1} parent=1 // pred_region
      %51 = dma.done [#allocation3], 2048
    $region33: #{tpu_custom_call.1} parent=1 // pred_fallthru
      _
    // Predicated region
    $region34: #{tpu_custom_call.1} parent=1 // pred_check
      _
    $region35: #{tpu_custom_call.1} parent=1 // pred_check_branch
      %53 = sbr.rel (0) target = $region37
    $region36: #{tpu_custom_call.1} parent=1 // pred_region
      %54 = dma.done [#allocation6], 2048
    $region37: #{tpu_custom_call.1} parent=1 // pred_fallthru
      _
    %v55 = vld [vmem:[%s0] sm:$0xff]
    %v56 = vld [vmem:[%s1] sm:$0xf]
    %v57 = vld [vmem:[%s2] sm:$0x1]
    %v59 = vlaneseq
    %v60 = vshrl.u32 %v59, 7
    %v61 = vsub.s32 0, %v60
    %v62 = vrot.slane %v57, %v61
    %vm64 = vcmask 31744
    %v66 = vsel %vm64, %v55, 0
    %vm68 = vcmask 1043456
    %v70 = vsel %vm68, %v56, 0
    %72 = vmatprep.subr.mxu0 0.0
    %73 = vmatpush1.msra.mxu0 0.0
    %74 = vmatprep.subr.mxu0 0.0
    %75 = vmatpush1.msra.mxu0 0.0
    %76 = vmatprep.subr.mxu0 0.0
    %77 = vmatpush1.msra.mxu0 0.0
    %78 = vmatprep.subr.mxu0 0.0
    %79 = vmatpush1.msra.mxu0 0.0
    %80 = vmatprep.subr.mxu0 0.0
    %81 = vmatpush1.msra.mxu0 0.0
    %82 = vmatprep.subr.mxu0 0.0
    %83 = vmatpush1.msra.mxu0 0.0
    %84 = vmatprep.subr.mxu0 0.0
    %85 = vmatpush1.msra.mxu0 0.0
    %86 = vmatprep.subr.mxu0 0.0
    %87 = vmatpush1.msra.mxu0 0.0
    %88 = vmatprep.subr.mxu0 0.0
    %89 = vmatpush1.msra.mxu0 0.0
    %90 = vmatprep.subr.mxu0 0.0
    %91 = vmatpush1.msra.mxu0 0.0
    %92 = vmatprep.subr.mxu0 0.0
    %93 = vmatpush1.msra.mxu0 0.0
    %94 = vmatprep.subr.mxu0 0.0
    %95 = vmatpush1.msra.mxu0 0.0
    %96 = vmatprep.subr.mxu0 0.0
    %97 = vmatpush1.msra.mxu0 0.0
    %98 = vmatprep.subr.mxu0 0.0
    %99 = vmatpush1.msra.mxu0 0.0
    %100 = vmatprep.subr.mxu0 0.0
    %101 = vmatpush1.msra.mxu0 0.0
    %102 = vmatprep.subr.mxu0 0.0
    %103 = vmatpush1.msra.mxu0 %v70
    %104 = vmatprep.subr.mxu0 0.0
    %105 = vmatpush2.msra.mxu0 0.0
    %106 = vmatprep.subr.mxu0 0.0
    %107 = vmatpush2.msra.mxu0 0.0
    %108 = vmatprep.subr.mxu0 0.0
    %109 = vmatpush2.msra.mxu0 0.0
    %110 = vmatprep.subr.mxu0 0.0
    %111 = vmatpush2.msra.mxu0 0.0
    %112 = vmatprep.subr.mxu0 0.0
    %113 = vmatpush2.msra.mxu0 0.0
    %114 = vmatprep.subr.mxu0 0.0
    %115 = vmatpush2.msra.mxu0 0.0
    %116 = vmatprep.subr.mxu0 0.0
    %117 = vmatpush2.msra.mxu0 0.0
    %118 = vmatprep.subr.mxu0 0.0
    %119 = vmatpush2.msra.mxu0 0.0
    %120 = vmatprep.subr.mxu0 0.0
    %121 = vmatpush2.msra.mxu0 0.0
    %122 = vmatprep.subr.mxu0 0.0
    %123 = vmatpush2.msra.mxu0 0.0
    %124 = vmatprep.subr.mxu0 0.0
    %125 = vmatpush2.msra.mxu0 0.0
    %126 = vmatprep.subr.mxu0 0.0
    %127 = vmatpush2.msra.mxu0 0.0
    %128 = vmatprep.subr.mxu0 0.0
    %129 = vmatpush2.msra.mxu0 0.0
    %130 = vmatprep.subr.mxu0 0.0
    %131 = vmatpush2.msra.mxu0 0.0
    %132 = vmatprep.subr.mxu0 0.0
    %133 = vmatpush2.msra.mxu0 0.0
    %134 = vmatprep.subr.mxu0 0.0
    %135 = vmatpush2.msra.mxu0 0.0
    %136 = vmatprep.mubr.f32.mxu0 0.0
    %137 = vmatmul.mubr.f32.gmra.mxu0 %v66
    %v138 = vpop.f32.mrf.mxu0
    %v139 = vadd.f32 %v62, %v138
    %v140 = vpop.f32.mrf.mxu0
    %141 = vdwg.mxu0
    %v142 = vmax.f32 %v139, 0.0
    %v143 = vld [vmem:[#allocation2] sm:$0xff]
    %v144 = vld [vmem:[#allocation2 + $0x8] sm:$0xff]
    %v145 = vld [vmem:[#allocation2 + $0x10] sm:$0xff]
    %v146 = vld [vmem:[#allocation2 + $0x18] sm:$0xff]
    %v147 = vld [vmem:[#allocation2 + $0x20] sm:$0xff]
    %v148 = vld [vmem:[#allocation2 + $0x28] sm:$0xff]
    %v149 = vld [vmem:[#allocation2 + $0x30] sm:$0xff]
    %v150 = vld [vmem:[#allocation2 + $0x38] sm:$0xff]
    %v151 = vld [vmem:[#allocation2 + $0x40] sm:$0xff]
    %v152 = vld [vmem:[#allocation2 + $0x48] sm:$0xff]
    %v153 = vld [vmem:[#allocation2 + $0x50] sm:$0xff]
    %v154 = vld [vmem:[#allocation2 + $0x58] sm:$0xff]
    %v155 = vld [vmem:[#allocation2 + $0x60] sm:$0xff]
    %v156 = vld [vmem:[#allocation2 + $0x68] sm:$0xff]
    %v157 = vld [vmem:[#allocation2 + $0x70] sm:$0xff]
    %v158 = vld [vmem:[#allocation2 + $0x78] sm:$0xff]
    %v159 = vld [vmem:[%s4] sm:$0x1]
    %v161 = vlaneseq
    %v162 = vshrl.u32 %v161, 7
    %v163 = vsub.s32 0, %v162
    %v164 = vrot.slane %v159, %v163
    %166 = vmatprep.subr.mxu0 0.0
    %167 = vmatpush1.msra.mxu0 %v158
    %168 = vmatprep.subr.mxu0 0.0
    %169 = vmatpush1.msra.mxu0 %v157
    %170 = vmatprep.subr.mxu0 0.0
    %171 = vmatpush1.msra.mxu0 %v156
    %172 = vmatprep.subr.mxu0 0.0
    %173 = vmatpush1.msra.mxu0 %v155
    %174 = vmatprep.subr.mxu0 0.0
    %175 = vmatpush1.msra.mxu0 %v154
    %176 = vmatprep.subr.mxu0 0.0
    %177 = vmatpush1.msra.mxu0 %v153
    %178 = vmatprep.subr.mxu0 0.0
    %179 = vmatpush1.msra.mxu0 %v152
    %180 = vmatprep.subr.mxu0 0.0
    %181 = vmatpush1.msra.mxu0 %v151
    %182 = vmatprep.subr.mxu0 0.0
    %183 = vmatpush1.msra.mxu0 %v150
    %184 = vmatprep.subr.mxu0 0.0
    %185 = vmatpush1.msra.mxu0 %v149
    %186 = vmatprep.subr.mxu0 0.0
    %187 = vmatpush1.msra.mxu0 %v148
    %188 = vmatprep.subr.mxu0 0.0
    %189 = vmatpush1.msra.mxu0 %v147
    %190 = vmatprep.subr.mxu0 0.0
    %191 = vmatpush1.msra.mxu0 %v146
    %192 = vmatprep.subr.mxu0 0.0
    %193 = vmatpush1.msra.mxu0 %v145
    %194 = vmatprep.subr.mxu0 0.0
    %195 = vmatpush1.msra.mxu0 %v144
    %196 = vmatprep.subr.mxu0 0.0
    %197 = vmatpush1.msra.mxu0 %v143
    %198 = vmatprep.subr.mxu0 0.0
    %199 = vmatpush2.msra.mxu0 0.0
    %200 = vmatprep.subr.mxu0 0.0
    %201 = vmatpush2.msra.mxu0 0.0
    %202 = vmatprep.subr.mxu0 0.0
    %203 = vmatpush2.msra.mxu0 0.0
    %204 = vmatprep.subr.mxu0 0.0
    %205 = vmatpush2.msra.mxu0 0.0
    %206 = vmatprep.subr.mxu0 0.0
    %207 = vmatpush2.msra.mxu0 0.0
    %208 = vmatprep.subr.mxu0 0.0
    %209 = vmatpush2.msra.mxu0 0.0
    %210 = vmatprep.subr.mxu0 0.0
    %211 = vmatpush2.msra.mxu0 0.0
    %212 = vmatprep.subr.mxu0 0.0
    %213 = vmatpush2.msra.mxu0 0.0
    %214 = vmatprep.subr.mxu0 0.0
    %215 = vmatpush2.msra.mxu0 0.0
    %216 = vmatprep.subr.mxu0 0.0
    %217 = vmatpush2.msra.mxu0 0.0
    %218 = vmatprep.subr.mxu0 0.0
    %219 = vmatpush2.msra.mxu0 0.0
    %220 = vmatprep.subr.mxu0 0.0
    %221 = vmatpush2.msra.mxu0 0.0
    %222 = vmatprep.subr.mxu0 0.0
    %223 = vmatpush2.msra.mxu0 0.0
    %224 = vmatprep.subr.mxu0 0.0
    %225 = vmatpush2.msra.mxu0 0.0
    %226 = vmatprep.subr.mxu0 0.0
    %227 = vmatpush2.msra.mxu0 0.0
    %228 = vmatprep.subr.mxu0 0.0
    %229 = vmatpush2.msra.mxu0 0.0
    %230 = vmatprep.mubr.f32.mxu0 0.0
    %231 = vmatmul.mubr.f32.gmra.mxu0 %v142
    %v232 = vpop.f32.mrf.mxu0
    %v233 = vadd.f32 %v164, %v232
    %v234 = vpop.f32.mrf.mxu0
    %235 = vdwg.mxu0
    %v236 = vmax.f32 %v233, 0.0
    %v237 = vld [vmem:[#allocation5] sm:$0xff]
    %v238 = vld [vmem:[#allocation5 + $0x8] sm:$0xff]
    %v239 = vld [vmem:[#allocation5 + $0x10] sm:$0xff]
    %v240 = vld [vmem:[#allocation5 + $0x18] sm:$0xff]
    %v241 = vld [vmem:[#allocation5 + $0x20] sm:$0xff]
    %v242 = vld [vmem:[#allocation5 + $0x28] sm:$0xff]
    %v243 = vld [vmem:[#allocation5 + $0x30] sm:$0xff]
    %v244 = vld [vmem:[#allocation5 + $0x38] sm:$0xff]
    %v245 = vld [vmem:[#allocation5 + $0x40] sm:$0xff]
    %v246 = vld [vmem:[#allocation5 + $0x48] sm:$0xff]
    %v247 = vld [vmem:[#allocation5 + $0x50] sm:$0xff]
    %v248 = vld [vmem:[#allocation5 + $0x58] sm:$0xff]
    %v249 = vld [vmem:[#allocation5 + $0x60] sm:$0xff]
    %v250 = vld [vmem:[#allocation5 + $0x68] sm:$0xff]
    %v251 = vld [vmem:[#allocation5 + $0x70] sm:$0xff]
    %v252 = vld [vmem:[#allocation5 + $0x78] sm:$0xff]
    %v253 = vld [vmem:[%s6] sm:$0x1]
    %v255 = vlaneseq
    %v256 = vshrl.u32 %v255, 7
    %v257 = vsub.s32 0, %v256
    %v258 = vrot.slane %v253, %v257
    %260 = vmatprep.subr.mxu0 0.0
    %261 = vmatpush1.msra.mxu0 %v252
    %262 = vmatprep.subr.mxu0 0.0
    %263 = vmatpush1.msra.mxu0 %v251
    %264 = vmatprep.subr.mxu0 0.0
    %265 = vmatpush1.msra.mxu0 %v250
    %266 = vmatprep.subr.mxu0 0.0
    %267 = vmatpush1.msra.mxu0 %v249
    %268 = vmatprep.subr.mxu0 0.0
    %269 = vmatpush1.msra.mxu0 %v248
    %270 = vmatprep.subr.mxu0 0.0
    %271 = vmatpush1.msra.mxu0 %v247
    %272 = vmatprep.subr.mxu0 0.0
    %273 = vmatpush1.msra.mxu0 %v246
    %274 = vmatprep.subr.mxu0 0.0
    %275 = vmatpush1.msra.mxu0 %v245
    %276 = vmatprep.subr.mxu0 0.0
    %277 = vmatpush1.msra.mxu0 %v244
    %278 = vmatprep.subr.mxu0 0.0
    %279 = vmatpush1.msra.mxu0 %v243
    %280 = vmatprep.subr.mxu0 0.0
    %281 = vmatpush1.msra.mxu0 %v242
    %282 = vmatprep.subr.mxu0 0.0
    %283 = vmatpush1.msra.mxu0 %v241
    %284 = vmatprep.subr.mxu0 0.0
    %285 = vmatpush1.msra.mxu0 %v240
    %286 = vmatprep.subr.mxu0 0.0
    %287 = vmatpush1.msra.mxu0 %v239
    %288 = vmatprep.subr.mxu0 0.0
    %289 = vmatpush1.msra.mxu0 %v238
    %290 = vmatprep.subr.mxu0 0.0
    %291 = vmatpush1.msra.mxu0 %v237
    %292 = vmatprep.subr.mxu0 0.0
    %293 = vmatpush2.msra.mxu0 0.0
    %294 = vmatprep.subr.mxu0 0.0
    %295 = vmatpush2.msra.mxu0 0.0
    %296 = vmatprep.subr.mxu0 0.0
    %297 = vmatpush2.msra.mxu0 0.0
    %298 = vmatprep.subr.mxu0 0.0
    %299 = vmatpush2.msra.mxu0 0.0
    %300 = vmatprep.subr.mxu0 0.0
    %301 = vmatpush2.msra.mxu0 0.0
    %302 = vmatprep.subr.mxu0 0.0
    %303 = vmatpush2.msra.mxu0 0.0
    %304 = vmatprep.subr.mxu0 0.0
    %305 = vmatpush2.msra.mxu0 0.0
    %306 = vmatprep.subr.mxu0 0.0
    %307 = vmatpush2.msra.mxu0 0.0
    %308 = vmatprep.subr.mxu0 0.0
    %309 = vmatpush2.msra.mxu0 0.0
    %310 = vmatprep.subr.mxu0 0.0
    %311 = vmatpush2.msra.mxu0 0.0
    %312 = vmatprep.subr.mxu0 0.0
    %313 = vmatpush2.msra.mxu0 0.0
    %314 = vmatprep.subr.mxu0 0.0
    %315 = vmatpush2.msra.mxu0 0.0
    %316 = vmatprep.subr.mxu0 0.0
    %317 = vmatpush2.msra.mxu0 0.0
    %318 = vmatprep.subr.mxu0 0.0
    %319 = vmatpush2.msra.mxu0 0.0
    %320 = vmatprep.subr.mxu0 0.0
    %321 = vmatpush2.msra.mxu0 0.0
    %322 = vmatprep.subr.mxu0 0.0
    %323 = vmatpush2.msra.mxu0 0.0
    %324 = vmatprep.mubr.f32.mxu0 0.0
    %325 = vmatmul.mubr.f32.gmra.mxu0 %v236
    %v326 = vpop.f32.mrf.mxu0
    %v327 = vadd.f32 %v258, %v326
    %v328 = vpop.f32.mrf.mxu0
    %329 = vdwg.mxu0
    %330 = vst [vmem:[#allocation7] sm:$0xff] %v327
    // Predicated region
    $region38: #{tpu_custom_call.1} parent=1 // pred_check
      _
    $region39: #{tpu_custom_call.1} parent=1 // pred_check_branch
      %332 = sbr.rel (0) target = $region41
    $region40: #{tpu_custom_call.1} parent=1 // pred_region
      %s334 = ssub.s32 128, 128
      %335 = vsyncadd [#allocation4], %s334
      %s337 = sshll.u32 [#allocation7], 4
      %s338 = int_to_ptr.vmem [resolvable:$true] %s337
      %340 = dma.vmem_to_hbm [thread:$0]  %s338, 128, %s7, [#allocation4]
    $region41: #{tpu_custom_call.1} parent=1 // pred_fallthru
      _
    // Predicated region
    $region42: #{tpu_custom_call.1} parent=1 // pred_check
      _
    $region43: #{tpu_custom_call.1} parent=1 // pred_check_branch
      %342 = sbr.rel (0) target = $region45
    $region44: #{tpu_custom_call.1} parent=1 // pred_region
      %343 = dma.done [#allocation4], 128
    $region45: #{tpu_custom_call.1} parent=1 // pred_fallthru
      _
    %344 = vsyncpa [#allocation3], 1
    %345 = vsyncpa [#allocation6], 1
    %346 = vsyncpa [#allocation4], 1

</llo_original>
